<compile_context>
chip_gen: v6e
topology: v6e:2x2x1
jax: 0.10.0
libtpu: 0.0.40
codegen_flags: <defaults>
</compile_context>

<pallas_src>
import math

import jax
import jax.numpy as jnp
import numpy as np
from jax.experimental import pallas as pl
from jax.experimental.pallas import tpu as pltpu

_PI = math.pi
_NUM_FEAT = 13  # 6 normalized box dims + 2 weighted rot dims + 4 BEV corners + 1 BEV area


def _aligned_bev(cx, cy, dx, dy, ang):
    # boxes3d_lidar_to_aligned_bev_boxes: swap (dx, dy) when heading closer to 90 deg.
    rot = jnp.abs(ang - jnp.floor(ang / _PI + 0.5) * _PI)  # |limit_period(ang, 0.5, pi)|
    cond = rot < (_PI / 4.0)
    ddx = jnp.where(cond, dx, dy)
    ddy = jnp.where(cond, dy, dx)
    return cx - 0.5 * ddx, cy - 0.5 * ddy, cx + 0.5 * ddx, cy + 0.5 * ddy


def _fast_recip(x):
    # EUP approximate reciprocal + one Newton step (keeps the divide off the VALU
    # slot while staying well inside the 1e-3 accuracy budget).
    r = pl.reciprocal(x, approx=True)
    return r * (2.0 - x * r)


def _pick_query_tile(q_padded, batch, n_tgt, n_cls, n_rep, vmem_budget=8 << 20):
    """Largest lane tile (multiple of 128 dividing q_padded) such that
    (a) per-step VMEM footprint stays under a small budget and
    (b) batch * num_q_tiles >= 2, so both v7x TensorCores get work at B == 1.
    On single-TC parts (v5e/v6e) with B >= 2 this simply returns q_padded."""
    nblk = q_padded // 128
    cands = [128 * d for d in range(nblk, 0, -1) if nblk % d == 0]

    def fits(tq):
        per_lane_io = (n_cls + _NUM_FEAT + n_rep * n_tgt) * 4 * 2  # double-buffered blocks
        per_lane_tmp = 6 * n_tgt * 4                               # live [T, tq] temporaries
        return (per_lane_io + per_lane_tmp) * tq <= vmem_budget

    for tq in cands:
        if fits(tq) and batch * (q_padded // tq) >= 2:
            return tq
    for tq in cands:
        if fits(tq):
            return tq
    return 128


def make_matcher_kernel(l1_scale, w_giou, n_repeat):
    l1_scale = float(l1_scale)
    w_giou = float(w_giou)
    n_repeat = int(n_repeat)

    def kernel(logits_ref, onehot_ref, pred_ref, tgt_ref, cost_ref):
        logits_t = logits_ref[0].astype(jnp.float32)  # [C, TQ]  (lane axis = queries)
        onehot_w = onehot_ref[0]                      # [T, C]   (-w_class)-scaled one-hot
        pred = pred_ref[0]                            # [13, TQ]
        tgt = tgt_ref[0]                              # [T, 13]

        num_classes = onehot_w.shape[1]

        # ---- softmax over classes (sublane axis); queries stay lane-dense.
        # Exact normalization (cheap [1,TQ] divide) to keep assignment parity.
        m = jnp.max(logits_t, axis=0, keepdims=True)                   # [1, TQ]
        e = jnp.exp(logits_t - m)                                      # [C, TQ]
        prob = e * (1.0 / jnp.sum(e, axis=0, keepdims=True))           # [C, TQ]

        # ---- classification cost doubles as the accumulator initializer:
        #      acc[t, q] = -w_class * prob[ids[t], q]
        if num_classes > 4:
            # one tiny MXU matmul instead of C VPU FMAs (MXU is otherwise idle)
            acc = jnp.dot(onehot_w, prob, preferred_element_type=jnp.float32)  # [T, TQ]
        else:
            acc = onehot_w[:, 0:1] * prob[0:1, :]
            for c in range(1, num_classes):
                acc = acc + onehot_w[:, c:c + 1] * prob[c:c + 1, :]

        # ---- L1 cost over 8 box/rot features; w_bbox pre-folded into the features
        if l1_scale == 1.0:
            for k in range(8):
                acc = acc + jnp.abs(pred[k:k + 1, :] - tgt[:, k:k + 1])
        else:  # negative w_bbox fallback: weight cannot be folded through |.|
            l1 = jnp.abs(pred[0:1, :] - tgt[:, 0:1])
            for k in range(1, 8):
                l1 = l1 + jnp.abs(pred[k:k + 1, :] - tgt[:, k:k + 1])
            acc = acc + l1_scale * l1

        # ---- nearest-BEV IoU (aligned BEV corners / areas precomputed in wrapper)
        ax1, ay1 = pred[8:9, :], pred[9:10, :]
        ax2, ay2 = pred[10:11, :], pred[11:12, :]
        area_a = pred[12:13, :]
        bx1, by1 = tgt[:, 8:9], tgt[:, 9:10]
        bx2, by2 = tgt[:, 10:11], tgt[:, 11:12]
        area_b = tgt[:, 12:13]
        iw = jnp.maximum(jnp.minimum(ax2, bx2) - jnp.maximum(ax1, bx1), 0.0)  # [T, TQ]
        ih = jnp.maximum(jnp.minimum(ay2, by2) - jnp.maximum(ay1, by1), 0.0)
        inter = iw * ih
        union = jnp.maximum(area_a + area_b - inter, 1e-6)
        acc = acc + inter * ((-w_giou) * _fast_recip(union))

        out_val = acc.astype(cost_ref.dtype)
        if n_repeat == 1:
            cost_ref[0] = out_val
        else:
            # use_mto column-repeat folded into ONE contiguous lane-dense store
            cost_ref[0] = jnp.concatenate([out_val] * n_repeat, axis=0)

    return kernel


def hungarian_matcher_align_cost(pred_logits, pred_boxes_match, pred_rot,
                                 tgt_labels, tgt_boxes, image_size_tgt,
                                 offset_tgt, grid_size_tgt, grid_size_xyz,
                                 *, cost_class=1.0, cost_bbox=1.0, cost_giou=1.0,
                                 use_mto=False, repeat_num=2):
    """Returns the matching cost in transposed layout [B, repeat*T, Q]
    (== torch's per-batch Cost [Q, T*repeat] transposed)."""
    B, Q, C = pred_logits.shape
    T = tgt_boxes.shape[1]
    f32 = jnp.float32

    fold_bbox = float(cost_bbox) >= 0.0
    feat_scale = float(cost_bbox) if fold_bbox else 1.0   # folded into L1 features
    l1_scale = 1.0 if fold_bbox else float(cost_bbox)     # residual in-kernel scale

    # ---- per-query features (feature-major, lane axis = Q): [B, 13, Q]
    boxes = pred_boxes_match.astype(f32)
    gx = grid_size_xyz.astype(f32)[:, None, :]                        # [B, 1, 3]
    p_c = (boxes[..., 0:3] / gx) * feat_scale
    p_d = (boxes[..., 3:6] / gx) * feat_scale
    p_rot = (0.5 * feat_scale) * pred_rot.astype(f32)                 # code_weight = [0.5, 0.5]
    ax1, ay1, ax2, ay2 = _aligned_bev(boxes[..., 0:1], boxes[..., 1:2],
                                      boxes[..., 3:4], boxes[..., 4:5], boxes[..., 6:7])
    area_a = (ax2 - ax1) * (ay2 - ay1)
    pred_feat = jnp.swapaxes(
        jnp.concatenate([p_c, p_d, p_rot, ax1, ay1, ax2, ay2, area_a], axis=-1), 1, 2)

    # ---- per-target features: [B, T, 13]
    tb = tgt_boxes.astype(f32)
    img = image_size_tgt.astype(f32)
    off = offset_tgt.astype(f32)
    gts = grid_size_tgt.astype(f32)
    t_c = (tb[..., 0:3] - off) / img
    t_d = tb[..., 3:6] / img
    ang = tb[..., 6:7]
    t_rot = 0.5 * jnp.concatenate([jnp.sin(ang), jnp.cos(ang)], axis=-1)
    b_c = t_c * gts
    b_d = t_d * gts
    bx1, by1, bx2, by2 = _aligned_bev(b_c[..., 0:1], b_c[..., 1:2],
                                      b_d[..., 0:1], b_d[..., 1:2], ang)
    area_b = (bx2 - bx1) * (by2 - by1)
    tgt_feat = jnp.concatenate([feat_scale * t_c, feat_scale * t_d, feat_scale * t_rot,
                                bx1, by1, bx2, by2, area_b], axis=-1)

    # ---- (-w_class)-scaled one-hot labels: [B, T, C] (replaces the ids input)
    onehot_w = (-float(cost_class)) * jax.nn.one_hot(
        tgt_labels.astype(jnp.int32), C, dtype=f32)

    # ---- query-major class logits, padded to a lane-dense multiple of 128
    logits_t = jnp.swapaxes(pred_logits, 1, 2)                        # [B, C, Q]
    q_padded = 128 * pl.cdiv(Q, 128)
    if q_padded != Q:
        pad = q_padded - Q
        logits_t = jnp.pad(logits_t, ((0, 0), (0, 0), (0, pad)))
        pred_feat = jnp.pad(pred_feat, ((0, 0), (0, 0), (0, pad)))

    n_rep = int(repeat_num) if use_mto else 1
    tq = _pick_query_tile(q_padded, B, T, C, n_rep)
    nq = q_padded // tq
    kernel = make_matcher_kernel(l1_scale, cost_giou, n_rep)

    cost_est = pl.CostEstimate(
        flops=int(B * T * q_padded * (2 * C + 30) + B * C * q_padded * 4),
        transcendentals=int(B * C * q_padded),
        bytes_accessed=int(4 * (B * C * q_padded + B * _NUM_FEAT * q_padded
                                + B * T * (_NUM_FEAT + C)
                                + B * n_rep * T * q_padded)))

    out = pl.pallas_call(
        kernel,
        out_shape=jax.ShapeDtypeStruct((B, n_rep * T, q_padded), jnp.float32),
        grid_spec=pltpu.PrefetchScalarGridSpec(
            num_scalar_prefetch=0,
            # NOTE: keep (B outer, Q-tiles inner): the [T,13] / [T,C] blocks map to
            # (b, 0, 0) and stay resident across the inner axis (no per-step re-DMA).
            grid=(B, nq),
            in_specs=[
                pl.BlockSpec((1, C, tq), lambda b, q: (b, 0, q)),
                pl.BlockSpec((1, T, C), lambda b, q: (b, 0, 0)),
                pl.BlockSpec((1, _NUM_FEAT, tq), lambda b, q: (b, 0, q)),
                pl.BlockSpec((1, T, _NUM_FEAT), lambda b, q: (b, 0, 0)),
            ],
            out_specs=pl.BlockSpec((1, n_rep * T, tq), lambda b, q: (b, 0, q)),
        ),
        compiler_params=pltpu.CompilerParams(
            dimension_semantics=("parallel", "parallel")),
        cost_estimate=cost_est,
    )(logits_t, onehot_w, pred_feat, tgt_feat)

    return out[:, :, :Q] if q_padded != Q else out


def _reference_cost(pl_logits, pb, pr, ids, tb, img, off, gt, gx, wc, wb, wg):
    pl_logits, pb, pr, tb, img, off, gt, gx = [
        np.asarray(a, np.float32) for a in (pl_logits, pb, pr, tb, img, off, gt, gx)]
    ids = np.asarray(ids, np.int64)
    B, Q, _ = pl_logits.shape
    T = tb.shape[1]
    out = np.zeros((B, Q, T), np.float32)
    for b in range(B):
        logits = pl_logits[b]
        ex = np.exp(logits - logits.max(-1, keepdims=True))
        prob = ex / ex.sum(-1, keepdims=True)
        cost_class = -prob[:, ids[b]]
        out_bbox = pb[b]
        out_c = out_bbox[:, :3] / gx[b]
        out_d = out_bbox[:, 3:6] / gx[b]
        tgt_c = (tb[b][:, :3] - off[b]) / img[b]
        tgt_d = tb[b][:, 3:6] / img[b]
        out6 = np.concatenate([out_c, out_d], 1)
        tgt6 = np.concatenate([tgt_c, tgt_d], 1)
        cost_bbox = np.abs(out6[:, None, :] - tgt6[None, :, :]).sum(-1)
        ang = tb[b][:, 6]
        tgt_rot = np.stack([np.sin(ang), np.cos(ang)], -1)
        cost_bbox += np.abs(0.5 * pr[b][:, None, :] - 0.5 * tgt_rot[None, :, :]).sum(-1)

        def bev(boxes):
            a = boxes[:, 6]
            rot = np.abs(a - np.floor(a / np.pi + 0.5) * np.pi)
            cond = rot < np.pi / 4
            dx = np.where(cond, boxes[:, 3], boxes[:, 4])
            dy = np.where(cond, boxes[:, 4], boxes[:, 3])
            return np.stack([boxes[:, 0] - dx / 2, boxes[:, 1] - dy / 2,
                             boxes[:, 0] + dx / 2, boxes[:, 1] + dy / 2], -1)

        bev_tgt = np.ones_like(tb[b])
        bev_tgt[:, :3] = tgt_c * gt[b]
        bev_tgt[:, 3:6] = tgt_d * gt[b]
        bev_tgt[:, 6] = tb[b][:, 6]
        A = bev(out_bbox)
        Bb = bev(bev_tgt)
        x_min = np.maximum(A[:, 0, None], Bb[None, :, 0])
        x_max = np.minimum(A[:, 2, None], Bb[None, :, 2])
        y_min = np.maximum(A[:, 1, None], Bb[None, :, 1])
        y_max = np.minimum(A[:, 3, None], Bb[None, :, 3])
        inter = np.clip(x_max - x_min, 0, None) * np.clip(y_max - y_min, 0, None)
        area_a = (A[:, 2] - A[:, 0]) * (A[:, 3] - A[:, 1])
        area_b = (Bb[:, 2] - Bb[:, 0]) * (Bb[:, 3] - Bb[:, 1])
        iou = inter / np.clip(area_a[:, None] + area_b[None, :] - inter, 1e-6, None)
        out[b] = wb * cost_bbox + wc * cost_class + wg * (-iou)
    return out


if __name__ == "__main__":
    B, Q, C, T = 2, 256, 4, 8
    key = jax.random.PRNGKey(0)
    k = jax.random.split(key, 9)

    grid_xyz_vals = jnp.array([176.0, 200.0, 40.0], jnp.float32)
    pc_extent = jnp.array([70.4, 80.0, 4.0], jnp.float32)
    pc_offset = jnp.array([0.0, -40.0, -3.0], jnp.float32)

    pred_logits = jax.random.normal(k[0], (B, Q, C), jnp.float32)
    centers_q = jax.random.uniform(k[1], (B, Q, 3), jnp.float32) * grid_xyz_vals
    sizes_q = jax.random.uniform(k[2], (B, Q, 3), jnp.float32) * 10.0 + 1.0
    angles_q = (jax.random.uniform(k[3], (B, Q, 1), jnp.float32) - 0.5) * 2.0 * math.pi
    pred_boxes_match = jnp.concatenate([centers_q, sizes_q, angles_q], axis=-1)
    rot_raw = jax.random.normal(k[4], (B, Q, 2), jnp.float32)
    pred_rot = rot_raw / jnp.linalg.norm(rot_raw, axis=-1, keepdims=True)

    tgt_labels = jax.random.randint(k[5], (B, T), 0, C, jnp.int32)
    centers_t = pc_offset + jax.random.uniform(k[6], (B, T, 3), jnp.float32) * pc_extent
    sizes_t = jax.random.uniform(k[7], (B, T, 3), jnp.float32) * 5.0 + 0.5
    angles_t = (jax.random.uniform(k[8], (B, T, 1), jnp.float32) - 0.5) * 2.0 * math.pi
    tgt_boxes = jnp.concatenate([centers_t, sizes_t, angles_t], axis=-1)

    image_size_tgt = jnp.broadcast_to(pc_extent, (B, T, 3)).astype(jnp.float32)
    offset_tgt = jnp.broadcast_to(pc_offset, (B, T, 3)).astype(jnp.float32)
    grid_size_tgt = jnp.broadcast_to(grid_xyz_vals, (B, T, 3)).astype(jnp.float32)
    grid_size_xyz = jnp.broadcast_to(grid_xyz_vals, (B, 3)).astype(jnp.float32)

    args = (pred_logits, pred_boxes_match, pred_rot, tgt_labels, tgt_boxes,
            image_size_tgt, offset_tgt, grid_size_tgt, grid_size_xyz)

    # use_mto = False
    cost_tq = jax.block_until_ready(hungarian_matcher_align_cost(
        *args, cost_class=1.0, cost_bbox=1.0, cost_giou=1.0, use_mto=False))

    ref = _reference_cost(pred_logits, pred_boxes_match, pred_rot, tgt_labels,
                          tgt_boxes, image_size_tgt, offset_tgt, grid_size_tgt,
                          grid_size_xyz, 1.0, 1.0, 1.0)
    np.testing.assert_allclose(np.transpose(np.asarray(cost_tq), (0, 2, 1)), ref,
                               rtol=2e-3, atol=2e-3)

    # use_mto = True (column repeat folded into a single contiguous store)
    cost_mto = jax.block_until_ready(hungarian_matcher_align_cost(
        *args, cost_class=1.0, cost_bbox=1.0, cost_giou=1.0,
        use_mto=True, repeat_num=2))
    np.testing.assert_allclose(np.transpose(np.asarray(cost_mto), (0, 2, 1)),
                               np.tile(ref, (1, 1, 2)), rtol=2e-3, atol=2e-3)

    # non-128-multiple Q path: exercises the pad-to-128 + slice-back logic
    cost_odd = jax.block_until_ready(hungarian_matcher_align_cost(
        pred_logits[:, :200], pred_boxes_match[:, :200], pred_rot[:, :200],
        tgt_labels, tgt_boxes, image_size_tgt, offset_tgt, grid_size_tgt,
        grid_size_xyz, cost_class=1.0, cost_bbox=1.0, cost_giou=1.0, use_mto=False))
    np.testing.assert_allclose(np.transpose(np.asarray(cost_odd), (0, 2, 1)),
                               ref[:, :200, :], rtol=2e-3, atol=2e-3)

    # TODO(synk): linear_sum_assignment (Hungarian algorithm) is a sequential host-side
    # algorithm with no clean Pallas equivalent; run it on host over the kernel's cost
    # matrix (transpose back to [Q, T] orientation to keep the original (query, target)
    # index convention).
    try:
        from scipy.optimize import linear_sum_assignment
        indices = []
        for b in range(B):
            i, j = linear_sum_assignment(np.asarray(cost_tq[b]).T)
            indices.append((np.asarray(i, np.int64), np.asarray(j, np.int64)))
    except ImportError:
        indices = None

    print("KERNEL_OK")
</pallas_src>

<mosaic_0001>
module attributes {stable_mosaic.version = 11 : i64} {
  func.func @kernel(%arg0: i32, %arg1: i32, %arg2: memref<1x4x256xf32, #tpu.memory_space<vmem>>, %arg3: memref<1x8x4xf32, #tpu.memory_space<vmem>>, %arg4: memref<1x13x256xf32, #tpu.memory_space<vmem>>, %arg5: memref<1x8x13xf32, #tpu.memory_space<vmem>>, %arg6: memref<1x8x256xf32, #tpu.memory_space<vmem>>) attributes {dimension_semantics = [#tpu.dimension_semantics<parallel>, #tpu.dimension_semantics<parallel>], iteration_bounds = array<i64: 2, 1>, scalar_prefetch = 0 : i64, scratch_operands = 0 : i64, tpu.core_type = #tpu.core_type<tc>, window_params = [{transform_indices = @transform_0, window_bounds = array<i64: 1, 4, 256>}, {transform_indices = @transform_1, window_bounds = array<i64: 1, 8, 4>}, {transform_indices = @transform_2, window_bounds = array<i64: 1, 13, 256>}, {transform_indices = @transform_3, window_bounds = array<i64: 1, 8, 13>}, {transform_indices = @transform_4, window_bounds = array<i64: 1, 8, 256>}]} {
    %c0 = arith.constant 0 : index
    %c0_0 = arith.constant 0 : index
    %c0_1 = arith.constant 0 : index
    %0 = vector.load %arg2[%c0, %c0_0, %c0_1] : memref<1x4x256xf32, #tpu.memory_space<vmem>>, vector<1x4x256xf32>
    %1 = vector.shape_cast %0 : vector<1x4x256xf32> to vector<4x256xf32>
    %c0_2 = arith.constant 0 : index
    %c0_3 = arith.constant 0 : index
    %c0_4 = arith.constant 0 : index
    %2 = vector.load %arg3[%c0_2, %c0_3, %c0_4] : memref<1x8x4xf32, #tpu.memory_space<vmem>>, vector<1x8x4xf32>
    %3 = vector.shape_cast %2 : vector<1x8x4xf32> to vector<8x4xf32>
    %c0_5 = arith.constant 0 : index
    %c0_6 = arith.constant 0 : index
    %c0_7 = arith.constant 0 : index
    %4 = vector.load %arg4[%c0_5, %c0_6, %c0_7] : memref<1x13x256xf32, #tpu.memory_space<vmem>>, vector<1x13x256xf32>
    %5 = vector.shape_cast %4 : vector<1x13x256xf32> to vector<13x256xf32>
    %c0_8 = arith.constant 0 : index
    %c0_9 = arith.constant 0 : index
    %c0_10 = arith.constant 0 : index
    %6 = vector.load %arg5[%c0_8, %c0_9, %c0_10] : memref<1x8x13xf32, #tpu.memory_space<vmem>>, vector<1x8x13xf32>
    %7 = vector.shape_cast %6 : vector<1x8x13xf32> to vector<8x13xf32>
    %cst = arith.constant dense<0xFF800000> : vector<256xf32>
    %8 = vector.multi_reduction <maximumf>, %1, %cst [0] : vector<4x256xf32> to vector<256xf32>
    %9 = vector.shape_cast %8 : vector<256xf32> to vector<1x256xf32>
    %10 = vector.broadcast %9 : vector<1x256xf32> to vector<4x256xf32>
    %11 = arith.subf %1, %10 : vector<4x256xf32>
    %12 = math.exp %11 : vector<4x256xf32>
    %cst_11 = arith.constant dense<0.000000e+00> : vector<256xf32>
    %13 = vector.multi_reduction <add>, %12, %cst_11 [0] : vector<4x256xf32> to vector<256xf32>
    %14 = vector.shape_cast %13 : vector<256xf32> to vector<1x256xf32>
    %cst_12 = arith.constant 1.000000e+00 : f32
    %15 = vector.broadcast %cst_12 : f32 to vector<1x256xf32>
    %16 = arith.divf %15, %14 : vector<1x256xf32>
    %17 = vector.broadcast %16 : vector<1x256xf32> to vector<4x256xf32>
    %18 = arith.mulf %12, %17 : vector<4x256xf32>
    %19 = vector.extract_strided_slice %3 {offsets = [0, 0], sizes = [8, 1], strides = [1, 1]} : vector<8x4xf32> to vector<8x1xf32>
    %20 = vector.extract_strided_slice %18 {offsets = [0, 0], sizes = [1, 256], strides = [1, 1]} : vector<4x256xf32> to vector<1x256xf32>
    %21 = vector.broadcast %19 : vector<8x1xf32> to vector<8x256xf32>
    %22 = vector.broadcast %20 : vector<1x256xf32> to vector<8x256xf32>
    %23 = arith.mulf %21, %22 : vector<8x256xf32>
    %24 = vector.extract_strided_slice %3 {offsets = [0, 1], sizes = [8, 1], strides = [1, 1]} : vector<8x4xf32> to vector<8x1xf32>
    %25 = vector.extract_strided_slice %18 {offsets = [1, 0], sizes = [1, 256], strides = [1, 1]} : vector<4x256xf32> to vector<1x256xf32>
    %26 = vector.broadcast %24 : vector<8x1xf32> to vector<8x256xf32>
    %27 = vector.broadcast %25 : vector<1x256xf32> to vector<8x256xf32>
    %28 = arith.mulf %26, %27 : vector<8x256xf32>
    %29 = arith.addf %23, %28 : vector<8x256xf32>
    %30 = vector.extract_strided_slice %3 {offsets = [0, 2], sizes = [8, 1], strides = [1, 1]} : vector<8x4xf32> to vector<8x1xf32>
    %31 = vector.extract_strided_slice %18 {offsets = [2, 0], sizes = [1, 256], strides = [1, 1]} : vector<4x256xf32> to vector<1x256xf32>
    %32 = vector.broadcast %30 : vector<8x1xf32> to vector<8x256xf32>
    %33 = vector.broadcast %31 : vector<1x256xf32> to vector<8x256xf32>
    %34 = arith.mulf %32, %33 : vector<8x256xf32>
    %35 = arith.addf %29, %34 : vector<8x256xf32>
    %36 = vector.extract_strided_slice %3 {offsets = [0, 3], sizes = [8, 1], strides = [1, 1]} : vector<8x4xf32> to vector<8x1xf32>
    %37 = vector.extract_strided_slice %18 {offsets = [3, 0], sizes = [1, 256], strides = [1, 1]} : vector<4x256xf32> to vector<1x256xf32>
    %38 = vector.broadcast %36 : vector<8x1xf32> to vector<8x256xf32>
    %39 = vector.broadcast %37 : vector<1x256xf32> to vector<8x256xf32>
    %40 = arith.mulf %38, %39 : vector<8x256xf32>
    %41 = arith.addf %35, %40 : vector<8x256xf32>
    %42 = vector.extract_strided_slice %5 {offsets = [0, 0], sizes = [1, 256], strides = [1, 1]} : vector<13x256xf32> to vector<1x256xf32>
    %43 = vector.extract_strided_slice %7 {offsets = [0, 0], sizes = [8, 1], strides = [1, 1]} : vector<8x13xf32> to vector<8x1xf32>
    %44 = vector.broadcast %42 : vector<1x256xf32> to vector<8x256xf32>
    %45 = vector.broadcast %43 : vector<8x1xf32> to vector<8x256xf32>
    %46 = arith.subf %44, %45 : vector<8x256xf32>
    %47 = math.absf %46 : vector<8x256xf32>
    %48 = arith.addf %41, %47 : vector<8x256xf32>
    %49 = vector.extract_strided_slice %5 {offsets = [1, 0], sizes = [1, 256], strides = [1, 1]} : vector<13x256xf32> to vector<1x256xf32>
    %50 = vector.extract_strided_slice %7 {offsets = [0, 1], sizes = [8, 1], strides = [1, 1]} : vector<8x13xf32> to vector<8x1xf32>
    %51 = vector.broadcast %49 : vector<1x256xf32> to vector<8x256xf32>
    %52 = vector.broadcast %50 : vector<8x1xf32> to vector<8x256xf32>
    %53 = arith.subf %51, %52 : vector<8x256xf32>
    %54 = math.absf %53 : vector<8x256xf32>
    %55 = arith.addf %48, %54 : vector<8x256xf32>
    %56 = vector.extract_strided_slice %5 {offsets = [2, 0], sizes = [1, 256], strides = [1, 1]} : vector<13x256xf32> to vector<1x256xf32>
    %57 = vector.extract_strided_slice %7 {offsets = [0, 2], sizes = [8, 1], strides = [1, 1]} : vector<8x13xf32> to vector<8x1xf32>
    %58 = vector.broadcast %56 : vector<1x256xf32> to vector<8x256xf32>
    %59 = vector.broadcast %57 : vector<8x1xf32> to vector<8x256xf32>
    %60 = arith.subf %58, %59 : vector<8x256xf32>
    %61 = math.absf %60 : vector<8x256xf32>
    %62 = arith.addf %55, %61 : vector<8x256xf32>
    %63 = vector.extract_strided_slice %5 {offsets = [3, 0], sizes = [1, 256], strides = [1, 1]} : vector<13x256xf32> to vector<1x256xf32>
    %64 = vector.extract_strided_slice %7 {offsets = [0, 3], sizes = [8, 1], strides = [1, 1]} : vector<8x13xf32> to vector<8x1xf32>
    %65 = vector.broadcast %63 : vector<1x256xf32> to vector<8x256xf32>
    %66 = vector.broadcast %64 : vector<8x1xf32> to vector<8x256xf32>
    %67 = arith.subf %65, %66 : vector<8x256xf32>
    %68 = math.absf %67 : vector<8x256xf32>
    %69 = arith.addf %62, %68 : vector<8x256xf32>
    %70 = vector.extract_strided_slice %5 {offsets = [4, 0], sizes = [1, 256], strides = [1, 1]} : vector<13x256xf32> to vector<1x256xf32>
    %71 = vector.extract_strided_slice %7 {offsets = [0, 4], sizes = [8, 1], strides = [1, 1]} : vector<8x13xf32> to vector<8x1xf32>
    %72 = vector.broadcast %70 : vector<1x256xf32> to vector<8x256xf32>
    %73 = vector.broadcast %71 : vector<8x1xf32> to vector<8x256xf32>
    %74 = arith.subf %72, %73 : vector<8x256xf32>
    %75 = math.absf %74 : vector<8x256xf32>
    %76 = arith.addf %69, %75 : vector<8x256xf32>
    %77 = vector.extract_strided_slice %5 {offsets = [5, 0], sizes = [1, 256], strides = [1, 1]} : vector<13x256xf32> to vector<1x256xf32>
    %78 = vector.extract_strided_slice %7 {offsets = [0, 5], sizes = [8, 1], strides = [1, 1]} : vector<8x13xf32> to vector<8x1xf32>
    %79 = vector.broadcast %77 : vector<1x256xf32> to vector<8x256xf32>
    %80 = vector.broadcast %78 : vector<8x1xf32> to vector<8x256xf32>
    %81 = arith.subf %79, %80 : vector<8x256xf32>
    %82 = math.absf %81 : vector<8x256xf32>
    %83 = arith.addf %76, %82 : vector<8x256xf32>
    %84 = vector.extract_strided_slice %5 {offsets = [6, 0], sizes = [1, 256], strides = [1, 1]} : vector<13x256xf32> to vector<1x256xf32>
    %85 = vector.extract_strided_slice %7 {offsets = [0, 6], sizes = [8, 1], strides = [1, 1]} : vector<8x13xf32> to vector<8x1xf32>
    %86 = vector.broadcast %84 : vector<1x256xf32> to vector<8x256xf32>
    %87 = vector.broadcast %85 : vector<8x1xf32> to vector<8x256xf32>
    %88 = arith.subf %86, %87 : vector<8x256xf32>
    %89 = math.absf %88 : vector<8x256xf32>
    %90 = arith.addf %83, %89 : vector<8x256xf32>
    %91 = vector.extract_strided_slice %5 {offsets = [7, 0], sizes = [1, 256], strides = [1, 1]} : vector<13x256xf32> to vector<1x256xf32>
    %92 = vector.extract_strided_slice %7 {offsets = [0, 7], sizes = [8, 1], strides = [1, 1]} : vector<8x13xf32> to vector<8x1xf32>
    %93 = vector.broadcast %91 : vector<1x256xf32> to vector<8x256xf32>
    %94 = vector.broadcast %92 : vector<8x1xf32> to vector<8x256xf32>
    %95 = arith.subf %93, %94 : vector<8x256xf32>
    %96 = math.absf %95 : vector<8x256xf32>
    %97 = arith.addf %90, %96 : vector<8x256xf32>
    %98 = vector.extract_strided_slice %5 {offsets = [8, 0], sizes = [1, 256], strides = [1, 1]} : vector<13x256xf32> to vector<1x256xf32>
    %99 = vector.extract_strided_slice %5 {offsets = [9, 0], sizes = [1, 256], strides = [1, 1]} : vector<13x256xf32> to vector<1x256xf32>
    %100 = vector.extract_strided_slice %5 {offsets = [10, 0], sizes = [1, 256], strides = [1, 1]} : vector<13x256xf32> to vector<1x256xf32>
    %101 = vector.extract_strided_slice %5 {offsets = [11, 0], sizes = [1, 256], strides = [1, 1]} : vector<13x256xf32> to vector<1x256xf32>
    %102 = vector.extract_strided_slice %5 {offsets = [12, 0], sizes = [1, 256], strides = [1, 1]} : vector<13x256xf32> to vector<1x256xf32>
    %103 = vector.extract_strided_slice %7 {offsets = [0, 8], sizes = [8, 1], strides = [1, 1]} : vector<8x13xf32> to vector<8x1xf32>
    %104 = vector.extract_strided_slice %7 {offsets = [0, 9], sizes = [8, 1], strides = [1, 1]} : vector<8x13xf32> to vector<8x1xf32>
    %105 = vector.extract_strided_slice %7 {offsets = [0, 10], sizes = [8, 1], strides = [1, 1]} : vector<8x13xf32> to vector<8x1xf32>
    %106 = vector.extract_strided_slice %7 {offsets = [0, 11], sizes = [8, 1], strides = [1, 1]} : vector<8x13xf32> to vector<8x1xf32>
    %107 = vector.extract_strided_slice %7 {offsets = [0, 12], sizes = [8, 1], strides = [1, 1]} : vector<8x13xf32> to vector<8x1xf32>
    %108 = vector.broadcast %100 : vector<1x256xf32> to vector<8x256xf32>
    %109 = vector.broadcast %105 : vector<8x1xf32> to vector<8x256xf32>
    %110 = arith.minimumf %108, %109 : vector<8x256xf32>
    %111 = vector.broadcast %98 : vector<1x256xf32> to vector<8x256xf32>
    %112 = vector.broadcast %103 : vector<8x1xf32> to vector<8x256xf32>
    %113 = arith.maximumf %111, %112 : vector<8x256xf32>
    %114 = arith.subf %110, %113 : vector<8x256xf32>
    %cst_13 = arith.constant 0.000000e+00 : f32
    %115 = vector.broadcast %cst_13 : f32 to vector<8x256xf32>
    %116 = arith.maximumf %114, %115 : vector<8x256xf32>
    %117 = vector.broadcast %101 : vector<1x256xf32> to vector<8x256xf32>
    %118 = vector.broadcast %106 : vector<8x1xf32> to vector<8x256xf32>
    %119 = arith.minimumf %117, %118 : vector<8x256xf32>
    %120 = vector.broadcast %99 : vector<1x256xf32> to vector<8x256xf32>
    %121 = vector.broadcast %104 : vector<8x1xf32> to vector<8x256xf32>
    %122 = arith.maximumf %120, %121 : vector<8x256xf32>
    %123 = arith.subf %119, %122 : vector<8x256xf32>
    %cst_14 = arith.constant 0.000000e+00 : f32
    %124 = vector.broadcast %cst_14 : f32 to vector<8x256xf32>
    %125 = arith.maximumf %123, %124 : vector<8x256xf32>
    %126 = arith.mulf %116, %125 : vector<8x256xf32>
    %127 = vector.broadcast %102 : vector<1x256xf32> to vector<8x256xf32>
    %128 = vector.broadcast %107 : vector<8x1xf32> to vector<8x256xf32>
    %129 = arith.addf %127, %128 : vector<8x256xf32>
    %130 = arith.subf %129, %126 : vector<8x256xf32>
    %cst_15 = arith.constant 9.99999997E-7 : f32
    %131 = vector.broadcast %cst_15 : f32 to vector<8x256xf32>
    %132 = arith.maximumf %130, %131 : vector<8x256xf32>
    %133 = tpu.reciprocal %132 {approx = true} : vector<8x256xf32> -> vector<8x256xf32>
    %134 = arith.mulf %132, %133 : vector<8x256xf32>
    %cst_16 = arith.constant 2.000000e+00 : f32
    %135 = vector.broadcast %cst_16 : f32 to vector<8x256xf32>
    %136 = arith.subf %135, %134 : vector<8x256xf32>
    %137 = arith.mulf %133, %136 : vector<8x256xf32>
    %cst_17 = arith.constant -1.000000e+00 : f32
    %138 = vector.broadcast %cst_17 : f32 to vector<8x256xf32>
    %139 = arith.mulf %138, %137 : vector<8x256xf32>
    %140 = arith.mulf %126, %139 : vector<8x256xf32>
    %141 = arith.addf %97, %140 : vector<8x256xf32>
    %c0_18 = arith.constant 0 : index
    %c0_19 = arith.constant 0 : index
    %c0_20 = arith.constant 0 : index
    %142 = vector.load %arg6[%c0_18, %c0_19, %c0_20] : memref<1x8x256xf32, #tpu.memory_space<vmem>>, vector<1x8x256xf32>
    %143 = vector.shape_cast %142 : vector<1x8x256xf32> to vector<8x256xf32>
    %144 = vector.shape_cast %141 : vector<8x256xf32> to vector<1x8x256xf32>
    tpu.vector_store %arg6[%c0_18, %c0_19, %c0_20], %144 {strides = array<i32>} : memref<1x8x256xf32, #tpu.memory_space<vmem>>, vector<1x8x256xf32>,
    return
  }
  func.func @transform_0(%arg0: i32, %arg1: i32) -> (i32, i32, i32) {
    %c0_i32 = arith.constant 0 : i32
    %c0_i32_0 = arith.constant 0 : i32
    return %arg0, %c0_i32, %arg1 : i32, i32, i32
  }
  func.func @transform_1(%arg0: i32, %arg1: i32) -> (i32, i32, i32) {
    %c0_i32 = arith.constant 0 : i32
    %c0_i32_0 = arith.constant 0 : i32
    %c0_i32_1 = arith.constant 0 : i32
    return %arg0, %c0_i32, %c0_i32_0 : i32, i32, i32
  }
  func.func @transform_2(%arg0: i32, %arg1: i32) -> (i32, i32, i32) {
    %c0_i32 = arith.constant 0 : i32
    %c0_i32_0 = arith.constant 0 : i32
    return %arg0, %c0_i32, %arg1 : i32, i32, i32
  }
  func.func @transform_3(%arg0: i32, %arg1: i32) -> (i32, i32, i32) {
    %c0_i32 = arith.constant 0 : i32
    %c0_i32_0 = arith.constant 0 : i32
    %c0_i32_1 = arith.constant 0 : i32
    return %arg0, %c0_i32, %c0_i32_0 : i32, i32, i32
  }
  func.func @transform_4(%arg0: i32, %arg1: i32) -> (i32, i32, i32) {
    %c0_i32 = arith.constant 0 : i32
    %c0_i32_0 = arith.constant 0 : i32
    return %arg0, %c0_i32, %arg1 : i32, i32, i32
  }
}

</mosaic_0001>

<llo_original>
// kernel: tpu_custom_call.1
$region0: #{tpu_custom_call.1}
  #allocation0 [shape = 'u32[]', space=smem, size = 0x4, offset = 0x4, fixed_abs, tag = 'smem constant byte address 0x4 - core index']
  #allocation1 [shape = 'u32[144,128]{1,0:T(1,128)}', space=vmem, size = 0x12000, scoped, tag = 'internal scratch']
  %s0 = inlined_call_operand.vmem [shape: f32[2,4,256], index: 0, kind: input, shape index: {}]
  %s1 = inlined_call_operand.vmem [shape: f32[2,8,4], index: 1, kind: input, shape index: {}]
  %s2 = inlined_call_operand.vmem [shape: f32[2,13,256], index: 2, kind: input, shape index: {}]
  %s3 = inlined_call_operand.vmem [shape: f32[2,8,13], index: 3, kind: input, shape index: {}]
  %s4 = inlined_call_operand.hbm [shape: f32[2,8,256], index: 4, kind: output, shape index: {}]
  %s5 = sld [smem:[#allocation0]]
  $region49: #{tpu_custom_call.1} parent=0
    _
  %s7 = ssub.s32 1, %s5
  %s8 = scalar_select 0, %s7, %s5
  $region1: #{tpu_custom_call.1} parent=0
    #allocation2 [shape = 'u8[16384]{0}', space=vmem, size = 0x4000, scoped, tag = 'output window, operand 0']
    #allocation3 [shape = 's32[2]{0}', space=sflag, size = 0x8, scoped, tag = 'scoped memory for tpu_custom_call.1']
    %9 = vsyncpa [#allocation3], 0
    %s10 = scalar_lea.sflag [#allocation3], 1
    %11 = vsyncpa %s10, 0
    loop: start=0, step=1, limit=4
    $region2: #{tpu_custom_call.1} parent=1 // loop_pre_header
      _
    $region3: #{tpu_custom_call.1} parent=1 // loop_header
      %s13 = sphi 0, %s17
      %p14 = scmp.ge.s32.totalorder %s13, 4
      %s20 = sphi 0, %s32
      %s21 = sphi 0, %s28
      %s22 = sphi 0, %s20
      %s23 = sphi 0, %s21
      %s24 = sphi 0, %s22
      %s25 = sphi 0, %s23
      %s37 = sphi 0, %s39
      %s40 = sphi 0, %s37
      %s41 = sphi 0, %s40
      %s57 = sphi 0, %s41
      %s63 = sphi 0, %s65
      %s66 = sphi 0, %s63
      %s67 = sphi 0, %s66
      %s83 = sphi 0, %s67
      %s91 = sphi 0, %s93
      %s94 = sphi 0, %s91
      %s95 = sphi 0, %s94
      %s111 = sphi 0, %s95
      %s117 = sphi 0, %s119
      %s120 = sphi 0, %s117
      %s121 = sphi 0, %s120
      %s137 = sphi 0, %s121
      %s145 = sphi 0, %s147
      %s148 = sphi 0, %s145
      %s149 = sphi 0, %s148
      %s165 = sphi 0, %s149
    $region4: #{tpu_custom_call.1} parent=1 // loop_header_branch
      %16 = sbr.rel (%p14) target = $region8
    $region5: #{tpu_custom_call.1} parent=1 // loop_body
      %s18 = ssub.s32 %s13, 1
      %s19 = ssub.s32 %s13, 2
      %s26 = sadd.s32 1, %s21
      %p27 = scmp.ge.s32.totalorder %s26, 1
      %s28 = scalar_select %p27, 0, %s26
      %s29 = sadd.s32 1, %s20
      %s30 = scalar_select %p27, %s29, %s20
      %p31 = scmp.ge.s32.totalorder %s30, 2
      %s32 = scalar_select %p31, 0, %s30
      %s33 = ssub.s32 %s20, %s32
      %s34 = ssub.s32 %s21, %s28
      %s35 = sor.u32 %s33, %s34
      %p36 = scmp.eq.s32.totalorder %s35, 0
      %s38 = sadd.s32 %s37, 1
      %s39 = scalar_select %p36, %s37, %s38
      %p42 = pneg %p36
      %p43 = scmp.eq.s32.totalorder %s13, 1
      %p44 = por %p42, %p43
      %p45 = scmp.ne.s32.totalorder %s37, %s40
      %p46 = scmp.eq.s32.totalorder %s13, 0
      %p47 = por %p45, %p46
      %p48 = scmp.ne.s32.totalorder %s37, %s40
      %p49 = scmp.eq.s32.totalorder %s18, 1
      %p50 = por %p48, %p49
      %p51 = scmp.ne.s32.totalorder %s40, %s41
      %p52 = scmp.eq.s32.totalorder %s18, 0
      %p53 = por %p51, %p52
      %p54 = scmp.ne.s32.totalorder %s40, %s41
      %p55 = scmp.eq.s32.totalorder %s19, 1
      %p56 = por %p54, %p55
      %p58 = scmp.ne.s32.totalorder %s41, %s57
      %p59 = scmp.eq.s32.totalorder %s19, 0
      %p60 = por %p58, %p59
      %s61 = ssub.s32 %s20, %s32
      %p62 = scmp.eq.s32.totalorder %s61, 0
      %s64 = sadd.s32 %s63, 1
      %s65 = scalar_select %p62, %s63, %s64
      %p68 = pneg %p62
      %p69 = scmp.eq.s32.totalorder %s13, 1
      %p70 = por %p68, %p69
      %p71 = scmp.ne.s32.totalorder %s63, %s66
      %p72 = scmp.eq.s32.totalorder %s13, 0
      %p73 = por %p71, %p72
      %p74 = scmp.ne.s32.totalorder %s63, %s66
      %p75 = scmp.eq.s32.totalorder %s18, 1
      %p76 = por %p74, %p75
      %p77 = scmp.ne.s32.totalorder %s66, %s67
      %p78 = scmp.eq.s32.totalorder %s18, 0
      %p79 = por %p77, %p78
      %p80 = scmp.ne.s32.totalorder %s66, %s67
      %p81 = scmp.eq.s32.totalorder %s19, 1
      %p82 = por %p80, %p81
      %p84 = scmp.ne.s32.totalorder %s67, %s83
      %p85 = scmp.eq.s32.totalorder %s19, 0
      %p86 = por %p84, %p85
      %s87 = ssub.s32 %s20, %s32
      %s88 = ssub.s32 %s21, %s28
      %s89 = sor.u32 %s87, %s88
      %p90 = scmp.eq.s32.totalorder %s89, 0
      %s92 = sadd.s32 %s91, 1
      %s93 = scalar_select %p90, %s91, %s92
      %p96 = pneg %p90
      %p97 = scmp.eq.s32.totalorder %s13, 1
      %p98 = por %p96, %p97
      %p99 = scmp.ne.s32.totalorder %s91, %s94
      %p100 = scmp.eq.s32.totalorder %s13, 0
      %p101 = por %p99, %p100
      %p102 = scmp.ne.s32.totalorder %s91, %s94
      %p103 = scmp.eq.s32.totalorder %s18, 1
      %p104 = por %p102, %p103
      %p105 = scmp.ne.s32.totalorder %s94, %s95
      %p106 = scmp.eq.s32.totalorder %s18, 0
      %p107 = por %p105, %p106
      %p108 = scmp.ne.s32.totalorder %s94, %s95
      %p109 = scmp.eq.s32.totalorder %s19, 1
      %p110 = por %p108, %p109
      %p112 = scmp.ne.s32.totalorder %s95, %s111
      %p113 = scmp.eq.s32.totalorder %s19, 0
      %p114 = por %p112, %p113
      %s115 = ssub.s32 %s20, %s32
      %p116 = scmp.eq.s32.totalorder %s115, 0
      %s118 = sadd.s32 %s117, 1
      %s119 = scalar_select %p116, %s117, %s118
      %p122 = pneg %p116
      %p123 = scmp.eq.s32.totalorder %s13, 1
      %p124 = por %p122, %p123
      %p125 = scmp.ne.s32.totalorder %s117, %s120
      %p126 = scmp.eq.s32.totalorder %s13, 0
      %p127 = por %p125, %p126
      %p128 = scmp.ne.s32.totalorder %s117, %s120
      %p129 = scmp.eq.s32.totalorder %s18, 1
      %p130 = por %p128, %p129
      %p131 = scmp.ne.s32.totalorder %s120, %s121
      %p132 = scmp.eq.s32.totalorder %s18, 0
      %p133 = por %p131, %p132
      %p134 = scmp.ne.s32.totalorder %s120, %s121
      %p135 = scmp.eq.s32.totalorder %s19, 1
      %p136 = por %p134, %p135
      %p138 = scmp.ne.s32.totalorder %s121, %s137
      %p139 = scmp.eq.s32.totalorder %s19, 0
      %p140 = por %p138, %p139
      %s141 = ssub.s32 %s20, %s32
      %s142 = ssub.s32 %s21, %s28
      %s143 = sor.u32 %s141, %s142
      %p144 = scmp.eq.s32.totalorder %s143, 0
      %s146 = sadd.s32 %s145, 1
      %s147 = scalar_select %p144, %s145, %s146
      %p150 = pneg %p144
      %p151 = scmp.eq.s32.totalorder %s13, 1
      %p152 = por %p150, %p151
      %p153 = scmp.ne.s32.totalorder %s145, %s148
      %p154 = scmp.eq.s32.totalorder %s13, 0
      %p155 = por %p153, %p154
      %p156 = scmp.ne.s32.totalorder %s145, %s148
      %p157 = scmp.eq.s32.totalorder %s18, 1
      %p158 = por %p156, %p157
      %p159 = scmp.ne.s32.totalorder %s148, %s149
      %p160 = scmp.eq.s32.totalorder %s18, 0
      %p161 = por %p159, %p160
      %p162 = scmp.ne.s32.totalorder %s148, %s149
      %p163 = scmp.eq.s32.totalorder %s19, 1
      %p164 = por %p162, %p163
      %p166 = scmp.ne.s32.totalorder %s149, %s165
      %p167 = scmp.eq.s32.totalorder %s19, 0
      %p168 = por %p166, %p167
      %p169 = scmp.le.s32.totalorder 1, %s13
      %p170 = scmp.lt.s32.totalorder %s13, 3
      %p171 = pnand %p169, %p170
      %p172 = pneg %p171
      // Predicated region
      $region9: #{tpu_custom_call.1} parent=5 // pred_check
        _
      $region10: #{tpu_custom_call.1} parent=5 // pred_check_branch
        %174 = sbr.rel (%p171) target = $region12
      $region11: #{tpu_custom_call.1} parent=5 // pred_region
        %s175 = ssub.s32 %s13, 1
      $region12: #{tpu_custom_call.1} parent=5 // pred_fallthru
        _
      %p176 = scmp.lt.s32.totalorder %s13, 2
      // Predicated region
      $region13: #{tpu_custom_call.1} parent=5 // pred_check
        %p177 = pneg %p176
      $region14: #{tpu_custom_call.1} parent=5 // pred_check_branch
        %179 = sbr.rel (%p177) target = $region16
      $region15: #{tpu_custom_call.1} parent=5 // pred_region
        // Predicated region
        $region17: #{tpu_custom_call.1} parent=15 // pred_check
          %p180 = pneg %p47
        $region18: #{tpu_custom_call.1} parent=15 // pred_check_branch
          %182 = sbr.rel (%p180) target = $region20
        $region19: #{tpu_custom_call.1} parent=15 // pred_region
          %s183 = smul.u32 2, %s21
          %p184 = scmp.lt.s32.totalorder %s20, 1
          %s185 = scalar_select %p184, %s20, 1
          %p186 = scmp.lt.s32.totalorder %s183, 1
          %s187 = scalar_select %p186, %s183, 1
          %s188 = smul.addr %s185, 2
          %s189 = sadd.s32 %s187, %s188
          %s190 = smul.addr %s189, 4
          %s191 = scalar_lea.vmem %s0, %s190
          %s192 = smul.u32 2, %s21
        $region20: #{tpu_custom_call.1} parent=15 // pred_fallthru
          _
        // Predicated region
        $region21: #{tpu_custom_call.1} parent=15 // pred_check
          %p193 = pneg %p73
        $region22: #{tpu_custom_call.1} parent=15 // pred_check_branch
          %195 = sbr.rel (%p193) target = $region24
        $region23: #{tpu_custom_call.1} parent=15 // pred_region
          %p196 = scmp.lt.s32.totalorder %s20, 1
          %s197 = scalar_select %p196, %s20, 1
          %s198 = smul.addr %s197, 8
          %s199 = scalar_lea.vmem %s1, %s198
        $region24: #{tpu_custom_call.1} parent=15 // pred_fallthru
          _
        // Predicated region
        $region25: #{tpu_custom_call.1} parent=15 // pred_check
          %p200 = pneg %p101
        $region26: #{tpu_custom_call.1} parent=15 // pred_check_branch
          %202 = sbr.rel (%p200) target = $region28
        $region27: #{tpu_custom_call.1} parent=15 // pred_region
          %s203 = smul.u32 2, %s21
          %p204 = scmp.lt.s32.totalorder %s20, 1
          %s205 = scalar_select %p204, %s20, 1
          %p206 = scmp.lt.s32.totalorder %s203, 1
          %s207 = scalar_select %p206, %s203, 1
          %s208 = smul.addr %s205, 4
          %s209 = sadd.s32 %s207, %s208
          %s210 = smul.addr %s209, 8
          %s211 = scalar_lea.vmem %s2, %s210
          %s212 = smul.u32 2, %s21
        $region28: #{tpu_custom_call.1} parent=15 // pred_fallthru
          _
        // Predicated region
        $region29: #{tpu_custom_call.1} parent=15 // pred_check
          %p213 = pneg %p127
        $region30: #{tpu_custom_call.1} parent=15 // pred_check_branch
          %215 = sbr.rel (%p213) target = $region32
        $region31: #{tpu_custom_call.1} parent=15 // pred_region
          %p216 = scmp.lt.s32.totalorder %s20, 1
          %s217 = scalar_select %p216, %s20, 1
          %s218 = smul.addr %s217, 8
          %s219 = scalar_lea.vmem %s3, %s218
        $region32: #{tpu_custom_call.1} parent=15 // pred_fallthru
          _
      $region16: #{tpu_custom_call.1} parent=5 // pred_fallthru
        _
      %p220 = scmp.le.s32.totalorder 1, %s13
      %p221 = scmp.lt.s32.totalorder %s13, 3
      %p222 = pnand %p220, %p221
      %p223 = pneg %p222
      // Predicated region
      $region33: #{tpu_custom_call.1} parent=5 // pred_check
        _
      $region34: #{tpu_custom_call.1} parent=5 // pred_check_branch
        %225 = sbr.rel (%p222) target = $region36
      $region35: #{tpu_custom_call.1} parent=5 // pred_region
        %s226 = ssub.s32 %s13, 1
        %s227 = smul.u32 2, %s23
        %p228 = scmp.lt.s32.totalorder %s22, 1
        %s229 = scalar_select %p228, %s22, 1
        %p230 = scmp.lt.s32.totalorder %s227, 1
        %s231 = scalar_select %p230, %s227, 1
        %s232 = smul.addr %s229, 2
        %s233 = sadd.s32 %s231, %s232
        %s234 = smul.addr %s233, 4
        %s235 = scalar_lea.vmem %s0, %s234
        %p236 = pneg %p53
        %p237 = pneg %p50
        %p238 = scmp.lt.s32.totalorder %s22, 1
        %s239 = scalar_select %p238, %s22, 1
        %s240 = smul.addr %s239, 8
        %s241 = scalar_lea.vmem %s1, %s240
        %p242 = pneg %p79
        %p243 = pneg %p76
        %s244 = smul.u32 2, %s23
        %p245 = scmp.lt.s32.totalorder %s22, 1
        %s246 = scalar_select %p245, %s22, 1
        %p247 = scmp.lt.s32.totalorder %s244, 1
        %s248 = scalar_select %p247, %s244, 1
        %s249 = smul.addr %s246, 4
        %s250 = sadd.s32 %s248, %s249
        %s251 = smul.addr %s250, 8
        %s252 = scalar_lea.vmem %s2, %s251
        %p253 = pneg %p107
        %p254 = pneg %p104
        %p255 = scmp.lt.s32.totalorder %s22, 1
        %s256 = scalar_select %p255, %s22, 1
        %s257 = smul.addr %s256, 8
        %s258 = scalar_lea.vmem %s3, %s257
        %p259 = pneg %p133
        %p260 = pneg %p130
        %p261 = pneg %p161
        %p262 = pneg %p158
        %s263 = sand.u32 %s148, 1
        %s264 = scalar_lea.sflag [#allocation3], %s263
        %s265 = sand.u32 %s148, 1
        %s266 = smul.addr %s265, 16
        %s267 = scalar_lea.vmem [#allocation2], %s266
        %s268 = smul.u32 2, %s23
        %p269 = scmp.lt.s32.totalorder %s22, 1
        %s270 = scalar_select %p269, %s22, 1
        %p271 = scmp.lt.s32.totalorder %s268, 1
        %s272 = scalar_select %p271, %s268, 1
        %s273 = smul.addr %s270, 2
        %s274 = sadd.s32 %s272, %s273
        %s275 = smul.addr %s274, 4
        %s276 = scalar_lea.vmem %s0, %s275
        %s277 = smul.u32 2, %s23
        %p278 = scmp.lt.s32.totalorder %s22, 1
        %s279 = scalar_select %p278, %s22, 1
        %s280 = smul.addr %s279, 8
        %s281 = scalar_lea.vmem %s1, %s280
        %s282 = smul.u32 2, %s23
        %p283 = scmp.lt.s32.totalorder %s22, 1
        %s284 = scalar_select %p283, %s22, 1
        %p285 = scmp.lt.s32.totalorder %s282, 1
        %s286 = scalar_select %p285, %s282, 1
        %s287 = smul.addr %s284, 4
        %s288 = sadd.s32 %s286, %s287
        %s289 = smul.addr %s288, 8
        %s290 = scalar_lea.vmem %s2, %s289
        %s291 = smul.u32 2, %s23
        %p292 = scmp.lt.s32.totalorder %s22, 1
        %s293 = scalar_select %p292, %s22, 1
        %s294 = smul.addr %s293, 8
        %s295 = scalar_lea.vmem %s3, %s294
        %s296 = smul.u32 2, %s23
        %v297 = vld [vmem:[%s276] sm:$0xff]
        %v298 = vld [vmem:[%s281] sm:$0xff]
        %v299 = vld [vmem:[%s290] sm:$0xff]
        %v300 = vld [vmem:[%s290 + $0x8] sm:$0xff]
        %v301 = vld [vmem:[%s290 + $0x10] sm:$0x1f]
        %v302 = vld [vmem:[%s290 + $0x18] sm:$0x1f]
        %v303 = vld [vmem:[%s295] sm:$0xff]
        %v305 = vcombine.high %v297, %v297
        %vm307 = vcmask 1043456
        %v308 = vsel %vm307, %v297, -inf
        %v309 = vrot.slane %v308, 4
        %v310 = vmax.f32 %v308, %v309
        %v311 = vrot.slane %v310, 2
        %v312 = vmax.f32 %v310, %v311
        %v313 = vrot.slane %v312, 1
        %v314 = vmax.f32 %v312, %v313
        %v315 = vsel %vm307, %v305, -inf
        %v316 = vrot.slane %v315, 4
        %v317 = vmax.f32 %v315, %v316
        %v318 = vrot.slane %v317, 2
        %v319 = vmax.f32 %v317, %v318
        %v320 = vrot.slane %v319, 1
        %v321 = vmax.f32 %v319, %v320
        %v324 = vcombine.low %v314, %v321
        %v326 = vsub.f32 %v297, %v324
        %v327 = vmul.f32 %v326, 1.442695
        %v328 = vpow.pop %v327
        %v330 = vcombine.high %v328, %v328
        %v332 = vsel %vm307, %v328, 0.0
        %v333 = vrot.slane %v332, 4
        %v334 = vadd.f32 %v332, %v333
        %v335 = vrot.slane %v334, 2
        %v336 = vadd.f32 %v334, %v335
        %v337 = vrot.slane %v336, 1
        %v338 = vadd.f32 %v336, %v337
        %v339 = vsel %vm307, %v330, 0.0
        %v340 = vrot.slane %v339, 4
        %v341 = vadd.f32 %v339, %v340
        %v342 = vrot.slane %v341, 2
        %v343 = vadd.f32 %v341, %v342
        %v344 = vrot.slane %v343, 1
        %v345 = vadd.f32 %v343, %v344
        %v346 = vrcp.pop %v338
        %v347 = vmul.f32 1.0, %v346
        %v348 = vrcp.pop %v345
        %v349 = vmul.f32 1.0, %v348
        %v352 = vcombine.low %v347, %v349
        %v354 = vmul.f32 %v328, %v352
        %356 = vset.pattern.permute.xlu0 0
        %357 = vperm.xlu0 %356, %v298
        %v358 = vpop.permute.xlu0 %357
        %v361 = vlaneseq
        %v362 = vshrl.u32 %v361, 7
        %v363 = vsub.s32 0, %v362
        %v364 = vrot.slane %v354, %v363
        %v365 = vlaneseq
        %v366 = vshrl.u32 %v365, 7
        %v367 = vsub.s32 4, %v366
        %v368 = vrot.slane %v354, %v367
        %v371 = vlaneseq
        %v372 = vshrl.u32 %v371, 7
        %v373 = vsub.s32 0, %v372
        %v374 = vrot.slane %v364, %v373
        %v375 = vlaneseq
        %v376 = vshrl.u32 %v375, 7
        %v377 = vsub.s32 0, %v376
        %v378 = vrot.slane %v368, %v377
        %v379 = vmul.f32 %v358, %v374
        %v380 = vmul.f32 %v358, %v378
        %381 = vset.pattern.permute.xlu0 1
        %382 = vperm.xlu0 %381, %v298
        %v383 = vpop.permute.xlu0 %382
        %v385 = vlaneseq
        %v386 = vshrl.u32 %v385, 7
        %v387 = vsub.s32 1, %v386
        %v388 = vrot.slane %v354, %v387
        %v389 = vlaneseq
        %v390 = vshrl.u32 %v389, 7
        %v391 = vsub.s32 5, %v390
        %v392 = vrot.slane %v354, %v391
        %v395 = vlaneseq
        %v396 = vshrl.u32 %v395, 7
        %v397 = vsub.s32 1, %v396
        %v398 = vrot.slane %v388, %v397
        %v399 = vlaneseq
        %v400 = vshrl.u32 %v399, 7
        %v401 = vsub.s32 1, %v400
        %v402 = vrot.slane %v392, %v401
        %v403 = vmul.f32 %v383, %v398
        %v404 = vmul.f32 %v383, %v402
        %v405 = vadd.f32 %v379, %v403
        %v406 = vadd.f32 %v380, %v404
        %407 = vset.pattern.permute.xlu0 2
        %408 = vperm.xlu0 %407, %v298
        %v409 = vpop.permute.xlu0 %408
        %v411 = vlaneseq
        %v412 = vshrl.u32 %v411, 7
        %v413 = vsub.s32 2, %v412
        %v414 = vrot.slane %v354, %v413
        %v415 = vlaneseq
        %v416 = vshrl.u32 %v415, 7
        %v417 = vsub.s32 6, %v416
        %v418 = vrot.slane %v354, %v417
        %v421 = vlaneseq
        %v422 = vshrl.u32 %v421, 7
        %v423 = vsub.s32 2, %v422
        %v424 = vrot.slane %v414, %v423
        %v425 = vlaneseq
        %v426 = vshrl.u32 %v425, 7
        %v427 = vsub.s32 2, %v426
        %v428 = vrot.slane %v418, %v427
        %v429 = vmul.f32 %v409, %v424
        %v430 = vmul.f32 %v409, %v428
        %v431 = vadd.f32 %v405, %v429
        %v432 = vadd.f32 %v406, %v430
        %433 = vset.pattern.permute.xlu0 3
        %434 = vperm.xlu0 %433, %v298
        %v435 = vpop.permute.xlu0 %434
        %v437 = vlaneseq
        %v438 = vshrl.u32 %v437, 7
        %v439 = vsub.s32 3, %v438
        %v440 = vrot.slane %v354, %v439
        %v441 = vlaneseq
        %v442 = vshrl.u32 %v441, 7
        %v443 = vsub.s32 7, %v442
        %v444 = vrot.slane %v354, %v443
        %v447 = vlaneseq
        %v448 = vshrl.u32 %v447, 7
        %v449 = vsub.s32 3, %v448
        %v450 = vrot.slane %v440, %v449
        %v451 = vlaneseq
        %v452 = vshrl.u32 %v451, 7
        %v453 = vsub.s32 3, %v452
        %v454 = vrot.slane %v444, %v453
        %v455 = vmul.f32 %v435, %v450
        %v456 = vmul.f32 %v435, %v454
        %v457 = vadd.f32 %v431, %v455
        %v458 = vadd.f32 %v432, %v456
        %v459 = vlaneseq
        %v460 = vshrl.u32 %v459, 7
        %v461 = vsub.s32 0, %v460
        %v462 = vrot.slane %v299, %v461
        %v463 = vlaneseq
        %v464 = vshrl.u32 %v463, 7
        %v465 = vsub.s32 0, %v464
        %v466 = vrot.slane %v300, %v465
        %468 = vset.pattern.permute.xlu0 0
        %469 = vperm.xlu0 %468, %v303
        %v470 = vpop.permute.xlu0 %469
        %v472 = vsub.f32 %v462, %v470
        %v473 = vsub.f32 %v466, %v470
        %v474 = vand.u32 2147483647, %v472
        %v475 = vand.u32 2147483647, %v473
        %v476 = vadd.f32 %v457, %v474
        %v477 = vadd.f32 %v458, %v475
        %v478 = vlaneseq
        %v479 = vshrl.u32 %v478, 7
        %v480 = vsub.s32 1, %v479
        %v481 = vrot.slane %v299, %v480
        %v482 = vlaneseq
        %v483 = vshrl.u32 %v482, 7
        %v484 = vsub.s32 1, %v483
        %v485 = vrot.slane %v300, %v484
        %486 = vset.pattern.permute.xlu0 1
        %487 = vperm.xlu0 %486, %v303
        %v488 = vpop.permute.xlu0 %487
        %v490 = vsub.f32 %v481, %v488
        %v491 = vsub.f32 %v485, %v488
        %v492 = vand.u32 2147483647, %v490
        %v493 = vand.u32 2147483647, %v491
        %v494 = vadd.f32 %v476, %v492
        %v495 = vadd.f32 %v477, %v493
        %v496 = vlaneseq
        %v497 = vshrl.u32 %v496, 7
        %v498 = vsub.s32 2, %v497
        %v499 = vrot.slane %v299, %v498
        %v500 = vlaneseq
        %v501 = vshrl.u32 %v500, 7
        %v502 = vsub.s32 2, %v501
        %v503 = vrot.slane %v300, %v502
        %504 = vset.pattern.permute.xlu0 2
        %505 = vperm.xlu0 %504, %v303
        %v506 = vpop.permute.xlu0 %505
        %v508 = vsub.f32 %v499, %v506
        %v509 = vsub.f32 %v503, %v506
        %v510 = vand.u32 2147483647, %v508
        %v511 = vand.u32 2147483647, %v509
        %v512 = vadd.f32 %v494, %v510
        %v513 = vadd.f32 %v495, %v511
        %v514 = vlaneseq
        %v515 = vshrl.u32 %v514, 7
        %v516 = vsub.s32 3, %v515
        %v517 = vrot.slane %v299, %v516
        %v518 = vlaneseq
        %v519 = vshrl.u32 %v518, 7
        %v520 = vsub.s32 3, %v519
        %v521 = vrot.slane %v300, %v520
        %522 = vset.pattern.permute.xlu0 3
        %523 = vperm.xlu0 %522, %v303
        %v524 = vpop.permute.xlu0 %523
        %v526 = vsub.f32 %v517, %v524
        %v527 = vsub.f32 %v521, %v524
        %v528 = vand.u32 2147483647, %v526
        %v529 = vand.u32 2147483647, %v527
        %v530 = vadd.f32 %v512, %v528
        %v531 = vadd.f32 %v513, %v529
        %v532 = vlaneseq
        %v533 = vshrl.u32 %v532, 7
        %v534 = vsub.s32 4, %v533
        %v535 = vrot.slane %v299, %v534
        %v536 = vlaneseq
        %v537 = vshrl.u32 %v536, 7
        %v538 = vsub.s32 4, %v537
        %v539 = vrot.slane %v300, %v538
        %540 = vset.pattern.permute.xlu0 4
        %541 = vperm.xlu0 %540, %v303
        %v542 = vpop.permute.xlu0 %541
        %v544 = vsub.f32 %v535, %v542
        %v545 = vsub.f32 %v539, %v542
        %v546 = vand.u32 2147483647, %v544
        %v547 = vand.u32 2147483647, %v545
        %v548 = vadd.f32 %v530, %v546
        %v549 = vadd.f32 %v531, %v547
        %v550 = vlaneseq
        %v551 = vshrl.u32 %v550, 7
        %v552 = vsub.s32 5, %v551
        %v553 = vrot.slane %v299, %v552
        %v554 = vlaneseq
        %v555 = vshrl.u32 %v554, 7
        %v556 = vsub.s32 5, %v555
        %v557 = vrot.slane %v300, %v556
        %558 = vset.pattern.permute.xlu0 5
        %559 = vperm.xlu0 %558, %v303
        %v560 = vpop.permute.xlu0 %559
        %v562 = vsub.f32 %v553, %v560
        %v563 = vsub.f32 %v557, %v560
        %v564 = vand.u32 2147483647, %v562
        %v565 = vand.u32 2147483647, %v563
        %v566 = vadd.f32 %v548, %v564
        %v567 = vadd.f32 %v549, %v565
        %v568 = vlaneseq
        %v569 = vshrl.u32 %v568, 7
        %v570 = vsub.s32 6, %v569
        %v571 = vrot.slane %v299, %v570
        %v572 = vlaneseq
        %v573 = vshrl.u32 %v572, 7
        %v574 = vsub.s32 6, %v573
        %v575 = vrot.slane %v300, %v574
        %576 = vset.pattern.permute.xlu0 6
        %577 = vperm.xlu0 %576, %v303
        %v578 = vpop.permute.xlu0 %577
        %v580 = vsub.f32 %v571, %v578
        %v581 = vsub.f32 %v575, %v578
        %v582 = vand.u32 2147483647, %v580
        %v583 = vand.u32 2147483647, %v581
        %v584 = vadd.f32 %v566, %v582
        %v585 = vadd.f32 %v567, %v583
        %v586 = vlaneseq
        %v587 = vshrl.u32 %v586, 7
        %v588 = vsub.s32 7, %v587
        %v589 = vrot.slane %v299, %v588
        %v590 = vlaneseq
        %v591 = vshrl.u32 %v590, 7
        %v592 = vsub.s32 7, %v591
        %v593 = vrot.slane %v300, %v592
        %594 = vset.pattern.permute.xlu0 7
        %595 = vperm.xlu0 %594, %v303
        %v596 = vpop.permute.xlu0 %595
        %v598 = vsub.f32 %v589, %v596
        %v599 = vsub.f32 %v593, %v596
        %v600 = vand.u32 2147483647, %v598
        %v601 = vand.u32 2147483647, %v599
        %v602 = vadd.f32 %v584, %v600
        %v603 = vadd.f32 %v585, %v601
        %v604 = vlaneseq
        %v605 = vshrl.u32 %v604, 7
        %v606 = vsub.s32 2, %v605
        %v607 = vrot.slane %v301, %v606
        %v608 = vlaneseq
        %v609 = vshrl.u32 %v608, 7
        %v610 = vsub.s32 2, %v609
        %v611 = vrot.slane %v302, %v610
        %612 = vset.pattern.permute.xlu0 10
        %613 = vperm.xlu0 %612, %v303
        %v614 = vpop.permute.xlu0 %613
        %v616 = vmin.f32 %v607, %v614
        %v617 = vmin.f32 %v611, %v614
        %v618 = vlaneseq
        %v619 = vshrl.u32 %v618, 7
        %v620 = vsub.s32 0, %v619
        %v621 = vrot.slane %v301, %v620
        %v622 = vlaneseq
        %v623 = vshrl.u32 %v622, 7
        %v624 = vsub.s32 0, %v623
        %v625 = vrot.slane %v302, %v624
        %626 = vset.pattern.permute.xlu0 8
        %627 = vperm.xlu0 %626, %v303
        %v628 = vpop.permute.xlu0 %627
        %v630 = vmax.f32 %v621, %v628
        %v631 = vmax.f32 %v625, %v628
        %v632 = vsub.f32 %v616, %v630
        %v633 = vsub.f32 %v617, %v631
        %v634 = vmax.f32 %v632, 0.0
        %v635 = vmax.f32 %v633, 0.0
        %v636 = vlaneseq
        %v637 = vshrl.u32 %v636, 7
        %v638 = vsub.s32 3, %v637
        %v639 = vrot.slane %v301, %v638
        %v640 = vlaneseq
        %v641 = vshrl.u32 %v640, 7
        %v642 = vsub.s32 3, %v641
        %v643 = vrot.slane %v302, %v642
        %644 = vset.pattern.permute.xlu0 11
        %645 = vperm.xlu0 %644, %v303
        %v646 = vpop.permute.xlu0 %645
        %v648 = vmin.f32 %v639, %v646
        %v649 = vmin.f32 %v643, %v646
        %v650 = vlaneseq
        %v651 = vshrl.u32 %v650, 7
        %v652 = vsub.s32 1, %v651
        %v653 = vrot.slane %v301, %v652
        %v654 = vlaneseq
        %v655 = vshrl.u32 %v654, 7
        %v656 = vsub.s32 1, %v655
        %v657 = vrot.slane %v302, %v656
        %658 = vset.pattern.permute.xlu0 9
        %659 = vperm.xlu0 %658, %v303
        %v660 = vpop.permute.xlu0 %659
        %v662 = vmax.f32 %v653, %v660
        %v663 = vmax.f32 %v657, %v660
        %v664 = vsub.f32 %v648, %v662
        %v665 = vsub.f32 %v649, %v663
        %v666 = vmax.f32 %v664, 0.0
        %v667 = vmax.f32 %v665, 0.0
        %v668 = vmul.f32 %v634, %v666
        %v669 = vmul.f32 %v635, %v667
        %v670 = vlaneseq
        %v671 = vshrl.u32 %v670, 7
        %v672 = vsub.s32 4, %v671
        %v673 = vrot.slane %v301, %v672
        %v674 = vlaneseq
        %v675 = vshrl.u32 %v674, 7
        %v676 = vsub.s32 4, %v675
        %v677 = vrot.slane %v302, %v676
        %678 = vset.pattern.permute.xlu0 12
        %679 = vperm.xlu0 %678, %v303
        %v680 = vpop.permute.xlu0 %679
        %v682 = vadd.f32 %v673, %v680
        %v683 = vadd.f32 %v677, %v680
        %v684 = vsub.f32 %v682, %v668
        %v685 = vsub.f32 %v683, %v669
        %v686 = vmax.f32 %v684, 1e-06
        %v687 = vmax.f32 %v685, 1e-06
        %v688 = vrcp.pop %v686
        %v689 = vrcp.pop %v687
        %v690 = vmul.f32 %v686, %v688
        %v691 = vmul.f32 %v687, %v689
        %v692 = vsub.f32 2.0, %v690
        %v693 = vsub.f32 2.0, %v691
        %v694 = vmul.f32 %v688, %v692
        %v695 = vmul.f32 %v689, %v693
        %v696 = vmul.f32 %v694, -1.0
        %v697 = vmul.f32 %v695, -1.0
        %v698 = vmul.f32 %v668, %v696
        %v699 = vmul.f32 %v669, %v697
        %v700 = vadd.f32 %v602, %v698
        %v701 = vadd.f32 %v603, %v699
        %702 = vst [vmem:[%s267] sm:$0xff] %v700
        %703 = vst [vmem:[%s267 + $0x8] sm:$0xff] %v701
        %s704 = sand.u32 %s148, 1
        %s705 = scalar_lea.sflag [#allocation3], %s704
        %s706 = sand.u32 %s148, 1
        %s707 = smul.addr %s706, 16
        %s708 = scalar_lea.vmem [#allocation2], %s707
        // Predicated region
        $region37: #{tpu_custom_call.1} parent=35 // pred_check
          %p709 = pneg %p158
        $region38: #{tpu_custom_call.1} parent=35 // pred_check_branch
          %711 = sbr.rel (%p709) target = $region40
        $region39: #{tpu_custom_call.1} parent=35 // pred_region
          %s712 = smul.u32 2, %s23
          %s714 = ssub.s32 256, 256
          %715 = vsyncadd %s705, %s714
          %s716 = smul.addr %s22, 2
          %s717 = sadd.s32 %s712, %s716
          %s718 = smul.addr %s717, 128
          %s719 = scalar_lea.hbm %s4, %s718
          %s721 = sshll.u32 %s708, 4
          %s722 = int_to_ptr.vmem [resolvable:$true] %s721
          %724 = dma.vmem_to_hbm [thread:$0]  %s722, 256, %s719, %s705
        $region40: #{tpu_custom_call.1} parent=35 // pred_fallthru
          _
      $region36: #{tpu_custom_call.1} parent=5 // pred_fallthru
        _
      %p725 = scmp.le.s32.totalorder 2, %s13
      // Predicated region
      $region41: #{tpu_custom_call.1} parent=5 // pred_check
        %p726 = pneg %p725
      $region42: #{tpu_custom_call.1} parent=5 // pred_check_branch
        %728 = sbr.rel (%p726) target = $region44
      $region43: #{tpu_custom_call.1} parent=5 // pred_region
        %s729 = ssub.s32 %s13, 2
        // Predicated region
        $region45: #{tpu_custom_call.1} parent=43 // pred_check
          %p730 = pneg %p164
        $region46: #{tpu_custom_call.1} parent=43 // pred_check_branch
          %732 = sbr.rel (%p730) target = $region48
        $region47: #{tpu_custom_call.1} parent=43 // pred_region
          %s733 = sand.u32 %s149, 1
          %s734 = scalar_lea.sflag [#allocation3], %s733
          %s735 = sand.u32 %s149, 1
          %s736 = smul.addr %s735, 16
          %s737 = scalar_lea.vmem [#allocation2], %s736
          %738 = dma.done %s734, 256
        $region48: #{tpu_custom_call.1} parent=43 // pred_fallthru
          _
      $region44: #{tpu_custom_call.1} parent=5 // pred_fallthru
        _
    $region6: #{tpu_custom_call.1} parent=1 // loop_footer
      %s17 = sadd.s32 1, %s13
    $region7: #{tpu_custom_call.1} parent=1 // loop_footer_branch
      %12 = sbr.rel target = $region3
    $region8: #{tpu_custom_call.1} parent=1 // loop_exit
      _
    %739 = vsyncpa [#allocation3], 1
    %s740 = scalar_lea.sflag [#allocation3], 1
    %741 = vsyncpa %s740, 1

</llo_original>
